<compile_context>
chip_gen: v7x
topology: tpu7x:2x2x1
jax: 0.10.0
libtpu: 0.0.40
codegen_flags: <defaults>
</compile_context>

<pallas_src>
import jax
import jax.numpy as jnp
from jax.experimental import pallas as pl
from jax.experimental.pallas import tpu as pltpu


def _round_up(x, m):
    return ((x + m - 1) // m) * m


# ---------------------------------------------------------------------------
# Kernel
# ---------------------------------------------------------------------------
def mlm_kernel(x_ref, w1_ref, b1_ref, w2_ref, b2_ref, o_ref, h_ref):
    # Grid = (M tiles, V tiles).  The V axis is "arbitrary" (sequential), so the
    # hidden activations for the current M tile are computed once at j == 0 and
    # reused for every V tile.  Do NOT mark the V axis "parallel".
    j = pl.program_id(1)

    @pl.when(j == 0)
    def _():
        h = jnp.dot(x_ref[...], w1_ref[...], preferred_element_type=jnp.float32)
        h = jnp.maximum(h + b1_ref[...], 0.0)          # bias + ReLU in f32 (VPU)
        h_ref[...] = h.astype(h_ref.dtype)             # cache for all V tiles

    out = jnp.dot(h_ref[...], w2_ref[...], preferred_element_type=jnp.float32)
    o_ref[...] = (out + b2_ref[...]).astype(o_ref.dtype)


# ---------------------------------------------------------------------------
# One-time weight preparation (pad to lane-aligned shapes, cast to compute dtype)
# ---------------------------------------------------------------------------
def prepare_params(w1, b1, w2, b2, *, compute_dtype=jnp.float32, tn=512):
    """Pad + cast weights ONCE (hoisted out of the per-call forward path).

    w1: [H, H] ([in, out], i.e. PyTorch dense.weight.T); b1: [H];
    w2: [H, V] (PyTorch linear.weight.T);                 b2: [V].
    compute_dtype=jnp.bfloat16 is recommended for real problem sizes
    (halves W2 HBM traffic, ~2x MXU rate; accumulation stays f32).
    """
    H = w1.shape[0]
    V = w2.shape[1]
    assert w1.shape == (H, H) and b1.shape == (H,)
    assert w2.shape == (H, V) and b2.shape == (V,)

    compute_dtype = jnp.dtype(compute_dtype)
    Hp = _round_up(H, 128)
    tn_eff = min(tn, _round_up(V, 128))        # lane-dense V tile
    Vp = _round_up(V, tn_eff)

    def pad2(a, rows, cols):
        a = a.astype(compute_dtype)
        if a.shape == (rows, cols):
            return a
        return jnp.pad(a, ((0, rows - a.shape[0]), (0, cols - a.shape[1])))

    w1_p = pad2(w1, Hp, Hp)
    w2_p = pad2(w2, Hp, Vp)
    # Biases stay f32 and are added in f32 inside the kernel (safe on v5e's
    # non-bf16 VPU and keeps accumulation precision).
    b1_p = jnp.pad(b1.astype(jnp.float32), (0, Hp - H)).reshape(1, Hp)
    b2_p = jnp.pad(b2.astype(jnp.float32), (0, Vp - V)).reshape(1, Vp)

    # TODO(synk): optional weight-only low-precision W2 path (int8 on v5e/v6e,
    # fp8 on v7x) with per-column scales would halve the dominant W2 stream again.
    return dict(w1=w1_p, b1=b1_p, w2=w2_p, b2=b2_p,
                H=H, V=V, Hp=Hp, Vp=Vp, tn=tn_eff,
                compute_dtype=compute_dtype)


# ---------------------------------------------------------------------------
# Forward
# ---------------------------------------------------------------------------
def mlm_forward(x, params, *, tm=1024, out_dtype=None,
                vmem_budget_bytes=56 * 1024 * 1024, w2_buffers=2):
    """x: [B, S, H] -> logits [B, S, V].

    tm is the M-tile size and the FLOP/byte knob for the re-streamed W2
    (default 1024; >= ~574 keeps v6e compute-bound, ~311 suffices on v7x,
    ~240 on v5e).  vmem_budget_bytes defaults to 56 MiB so tiles fit v7x's
    64 MiB VMEM; raise to ~100 MiB on v5e/v6e (128 MiB parts) if desired.
    out_dtype=jnp.bfloat16 halves the logits writeback when the loss allows.
    """
    B, S, H = x.shape
    assert H == params["H"], "hidden dim mismatch with prepared params"
    V = params["V"]
    Hp, Vp, tn_eff = params["Hp"], params["Vp"], params["tn"]
    cdt = params["compute_dtype"]
    out_dtype = jnp.dtype(out_dtype) if out_dtype is not None else x.dtype

    M = B * S
    sub = 16                                    # sublane multiple, ok for f32 & bf16
    tm_eff = _round_up(min(tm, M), sub)
    # v7x megacore: if a single tile would hold all of M, split it in two so the
    # "parallel" M axis gives both TensorCores work.
    if M <= tm_eff and M >= 2 * sub:
        tm_eff = _round_up(-(-M // 2), sub)

    cdt_size = jnp.dtype(cdt).itemsize
    out_size = jnp.dtype(out_dtype).itemsize

    def vmem_need(tm_, tn_):
        return (2 * tm_ * Hp * cdt_size              # x tiles (double-buffered)
                + 1 * Hp * Hp * cdt_size             # W1 resident, single-buffered
                + 1 * Hp * 4                         # b1 resident (f32)
                + w2_buffers * Hp * tn_ * cdt_size   # W2 stream
                + w2_buffers * tn_ * 4               # b2 stream (f32)
                + 2 * tm_ * tn_ * out_size           # out tiles
                + tm_ * Hp * cdt_size)               # hidden scratch

    # Shrink tm (never tn: keep output tiles lane-dense) if we would blow VMEM.
    while vmem_need(tm_eff, tn_eff) > vmem_budget_bytes and tm_eff > sub:
        tm_eff = max(sub, _round_up(tm_eff // 2, sub))
    # TODO(synk): for H >= ~2048 the resident (Hp, Hp) W1 alone can exceed v7x's
    # 64 MiB VMEM; stream W1 over a K grid axis (or emit_pipeline) in that regime.

    Mp = _round_up(M, tm_eff)
    x2d = x.reshape(M, H).astype(cdt)
    if (Mp, Hp) != (M, H):
        x2d = jnp.pad(x2d, ((0, Mp - M), (0, Hp - H)))

    grid = (Mp // tm_eff, Vp // tn_eff)
    n_m_tiles = grid[0]

    bytes_accessed = (Mp * Hp * cdt_size                       # x read once
                      + Hp * Hp * cdt_size                     # W1 (resident; ~once)
                      + Hp * Vp * cdt_size * n_m_tiles         # W2 re-streamed / M tile
                      + (Hp + Vp) * 4
                      + Mp * Vp * out_size)                    # logits writeback

    vmem_limit = int(min(max(vmem_need(tm_eff, tn_eff) + (8 << 20), 32 << 20),
                         vmem_budget_bytes))

    out_p = pl.pallas_call(
        mlm_kernel,
        out_shape=jax.ShapeDtypeStruct((Mp, Vp), out_dtype),
        grid=grid,
        in_specs=[
            pl.BlockSpec((tm_eff, Hp), lambda i, j: (i, 0)),       # x: one M tile
            pl.BlockSpec((Hp, Hp), lambda i, j: (0, 0),
                         pipeline_mode=pl.Buffered(1)),            # W1: resident, 1-buf
            pl.BlockSpec((1, Hp), lambda i, j: (0, 0),
                         pipeline_mode=pl.Buffered(1)),            # b1: resident, 1-buf
            pl.BlockSpec((Hp, tn_eff), lambda i, j: (0, j),
                         pipeline_mode=pl.Buffered(w2_buffers)),   # W2: streamed over V
            pl.BlockSpec((1, tn_eff), lambda i, j: (0, j),
                         pipeline_mode=pl.Buffered(w2_buffers)),   # b2: streamed over V
        ],
        out_specs=pl.BlockSpec((tm_eff, tn_eff), lambda i, j: (i, j)),
        scratch_shapes=[pltpu.VMEM((tm_eff, Hp), cdt)],            # cached hidden
        compiler_params=pltpu.CompilerParams(
            dimension_semantics=("parallel", "arbitrary"),
            vmem_limit_bytes=vmem_limit),
        cost_estimate=pl.CostEstimate(
            flops=int(2 * M * H * (H + V)),
            transcendentals=0,
            bytes_accessed=int(bytes_accessed)),
    )(x2d, params["w1"], params["b1"], params["w2"], params["b2"])

    return out_p[:M, :V].reshape(B, S, V)


def masked_language_model(x, w1, b1, w2, b2, *, tm=1024, tn=512,
                          compute_dtype=None, out_dtype=None,
                          vmem_budget_bytes=56 * 1024 * 1024, w2_buffers=2):
    """Convenience wrapper (prepares weights then runs forward).  For repeated
    calls, call prepare_params() once and reuse mlm_forward()."""
    compute_dtype = compute_dtype if compute_dtype is not None else x.dtype
    params = prepare_params(w1, b1, w2, b2, compute_dtype=compute_dtype, tn=tn)
    return mlm_forward(x, params, tm=tm, out_dtype=out_dtype,
                       vmem_budget_bytes=vmem_budget_bytes, w2_buffers=w2_buffers)


def init_params(key, hidden_dim, vocab_size, dtype=jnp.float32):
    """Deterministic init mimicking nn.Linear default (uniform +-1/sqrt(fan_in)).
    Weights are stored as [in, out] (i.e. PyTorch weight transposed)."""
    k1, k2, k3, k4 = jax.random.split(key, 4)
    lim = 1.0 / jnp.sqrt(hidden_dim)
    w1 = jax.random.uniform(k1, (hidden_dim, hidden_dim), dtype, -lim, lim)
    b1 = jax.random.uniform(k2, (hidden_dim,), dtype, -lim, lim)
    w2 = jax.random.uniform(k3, (hidden_dim, vocab_size), dtype, -lim, lim)
    b2 = jax.random.uniform(k4, (vocab_size,), dtype, -lim, lim)
    return w1, b1, w2, b2


if __name__ == "__main__":
    key = jax.random.PRNGKey(0)
    kx, kp = jax.random.split(key)

    batch, seq, hidden_dim, vocab_size = 2, 8, 32, 64
    x = jax.random.normal(kx, (batch, seq, hidden_dim), dtype=jnp.float32)
    w1, b1, w2, b2 = init_params(kp, hidden_dim, vocab_size)

    # Pure-JAX reference (same math as the PyTorch module forward).
    ref = jnp.maximum(x @ w1 + b1, 0.0) @ w2 + b2

    # f32 compute path (weights prepared once, forward reused): tight check.
    params_f32 = prepare_params(w1, b1, w2, b2, compute_dtype=jnp.float32)
    out = jax.block_until_ready(mlm_forward(x, params_f32))
    assert out.shape == (batch, seq, vocab_size)
    assert jnp.allclose(out, ref, atol=1e-4, rtol=1e-4)

    # bf16 compute path (f32 accumulation, f32 biases): loose check; this is the
    # recommended configuration for real problem sizes.
    params_bf16 = prepare_params(w1, b1, w2, b2, compute_dtype=jnp.bfloat16)
    out_bf16 = jax.block_until_ready(mlm_forward(x, params_bf16))
    assert out_bf16.shape == (batch, seq, vocab_size)
    assert jnp.allclose(out_bf16.astype(jnp.float32), ref, atol=1e-1, rtol=1e-1)

    # Convenience one-shot wrapper still works.
    out2 = jax.block_until_ready(masked_language_model(x, w1, b1, w2, b2))
    assert jnp.allclose(out2, ref, atol=1e-4, rtol=1e-4)

    print("KERNEL_OK")
</pallas_src>

<mosaic_0001>
module attributes {stable_mosaic.version = 11 : i64} {
  func.func @mlm_kernel(%arg0: i32, %arg1: i32, %arg2: memref<16x128xf32, #tpu.memory_space<vmem>>, %arg3: memref<128x128xf32, #tpu.memory_space<vmem>>, %arg4: memref<1x128xf32, #tpu.memory_space<vmem>>, %arg5: memref<128x128xf32, #tpu.memory_space<vmem>>, %arg6: memref<1x128xf32, #tpu.memory_space<vmem>>, %arg7: memref<16x128xf32, #tpu.memory_space<vmem>>, %arg8: memref<16x128xf32, #tpu.memory_space<vmem>>) attributes {dimension_semantics = [#tpu.dimension_semantics<parallel>, #tpu.dimension_semantics<arbitrary>], iteration_bounds = array<i64: 1, 1>, scalar_prefetch = 0 : i64, scratch_operands = 1 : i64, tpu.core_type = #tpu.core_type<tc>, window_params = [{transform_indices = @transform_0, window_bounds = array<i64: 16, 128>}, {pipeline_mode = #tpu.pipeline_mode<synchronous>, transform_indices = @transform_1, window_bounds = array<i64: 128, 128>}, {pipeline_mode = #tpu.pipeline_mode<synchronous>, transform_indices = @transform_2, window_bounds = array<i64: 1, 128>}, {pipeline_mode = #tpu.pipeline_mode<double_buffered>, transform_indices = @transform_3, window_bounds = array<i64: 128, 128>}, {pipeline_mode = #tpu.pipeline_mode<double_buffered>, transform_indices = @transform_4, window_bounds = array<i64: 1, 128>}, {transform_indices = @transform_5, window_bounds = array<i64: 16, 128>}]} {
    %c0_i32 = arith.constant 0 : i32
    %0 = arith.cmpi eq, %arg1, %c0_i32 : i32
    %1 = arith.extui %0 : i1 to i32
    %c0_i32_0 = arith.constant 0 : i32
    %2 = arith.cmpi ne, %1, %c0_i32_0 : i32
    scf.if %2 {
      %c0_8 = arith.constant 0 : index
      %c0_9 = arith.constant 0 : index
      %10 = vector.load %arg2[%c0_8, %c0_9] : memref<16x128xf32, #tpu.memory_space<vmem>>, vector<16x128xf32>
      %c0_10 = arith.constant 0 : index
      %c0_11 = arith.constant 0 : index
      %11 = vector.load %arg3[%c0_10, %c0_11] : memref<128x128xf32, #tpu.memory_space<vmem>>, vector<128x128xf32>
      %cst_12 = arith.constant dense<0.000000e+00> : vector<16x128xf32>
      %12 = tpu.matmul %10, %11, %cst_12 {dimension_numbers = #tpu.dot_dimension_numbers<[1], [0], [0], [1], [0, 0, 1, 1], [], []>} : vector<16x128xf32>, vector<128x128xf32>, vector<16x128xf32> -> vector<16x128xf32>
      %c0_13 = arith.constant 0 : index
      %c0_14 = arith.constant 0 : index
      %13 = vector.load %arg4[%c0_13, %c0_14] : memref<1x128xf32, #tpu.memory_space<vmem>>, vector<1x128xf32>
      %14 = vector.broadcast %13 : vector<1x128xf32> to vector<16x128xf32>
      %15 = arith.addf %12, %14 : vector<16x128xf32>
      %cst_15 = arith.constant 0.000000e+00 : f32
      %16 = vector.broadcast %cst_15 : f32 to vector<16x128xf32>
      %17 = arith.maximumf %15, %16 : vector<16x128xf32>
      %c0_16 = arith.constant 0 : index
      %c0_17 = arith.constant 0 : index
      %18 = vector.load %arg8[%c0_16, %c0_17] : memref<16x128xf32, #tpu.memory_space<vmem>>, vector<16x128xf32>
      tpu.vector_store %arg8[%c0_16, %c0_17], %17 {strides = array<i32>} : memref<16x128xf32, #tpu.memory_space<vmem>>, vector<16x128xf32>,
    } else {
    }
    %c0 = arith.constant 0 : index
    %c0_1 = arith.constant 0 : index
    %3 = vector.load %arg8[%c0, %c0_1] : memref<16x128xf32, #tpu.memory_space<vmem>>, vector<16x128xf32>
    %c0_2 = arith.constant 0 : index
    %c0_3 = arith.constant 0 : index
    %4 = vector.load %arg5[%c0_2, %c0_3] : memref<128x128xf32, #tpu.memory_space<vmem>>, vector<128x128xf32>
    %cst = arith.constant dense<0.000000e+00> : vector<16x128xf32>
    %5 = tpu.matmul %3, %4, %cst {dimension_numbers = #tpu.dot_dimension_numbers<[1], [0], [0], [1], [0, 0, 1, 1], [], []>} : vector<16x128xf32>, vector<128x128xf32>, vector<16x128xf32> -> vector<16x128xf32>
    %c0_4 = arith.constant 0 : index
    %c0_5 = arith.constant 0 : index
    %6 = vector.load %arg6[%c0_4, %c0_5] : memref<1x128xf32, #tpu.memory_space<vmem>>, vector<1x128xf32>
    %7 = vector.broadcast %6 : vector<1x128xf32> to vector<16x128xf32>
    %8 = arith.addf %5, %7 : vector<16x128xf32>
    %c0_6 = arith.constant 0 : index
    %c0_7 = arith.constant 0 : index
    %9 = vector.load %arg7[%c0_6, %c0_7] : memref<16x128xf32, #tpu.memory_space<vmem>>, vector<16x128xf32>
    tpu.vector_store %arg7[%c0_6, %c0_7], %8 {strides = array<i32>} : memref<16x128xf32, #tpu.memory_space<vmem>>, vector<16x128xf32>,
    return
  }
  func.func @transform_0(%arg0: i32, %arg1: i32) -> (i32, i32) {
    %c0_i32 = arith.constant 0 : i32
    %c0_i32_0 = arith.constant 0 : i32
    return %arg0, %c0_i32 : i32, i32
  }
  func.func @transform_1(%arg0: i32, %arg1: i32) -> (i32, i32) {
    %c0_i32 = arith.constant 0 : i32
    %c0_i32_0 = arith.constant 0 : i32
    %c0_i32_1 = arith.constant 0 : i32
    return %c0_i32, %c0_i32_0 : i32, i32
  }
  func.func @transform_2(%arg0: i32, %arg1: i32) -> (i32, i32) {
    %c0_i32 = arith.constant 0 : i32
    %c0_i32_0 = arith.constant 0 : i32
    %c0_i32_1 = arith.constant 0 : i32
    return %c0_i32, %c0_i32_0 : i32, i32
  }
  func.func @transform_3(%arg0: i32, %arg1: i32) -> (i32, i32) {
    %c0_i32 = arith.constant 0 : i32
    %c0_i32_0 = arith.constant 0 : i32
    return %c0_i32, %arg1 : i32, i32
  }
  func.func @transform_4(%arg0: i32, %arg1: i32) -> (i32, i32) {
    %c0_i32 = arith.constant 0 : i32
    %c0_i32_0 = arith.constant 0 : i32
    return %c0_i32, %arg1 : i32, i32
  }
  func.func @transform_5(%arg0: i32, %arg1: i32) -> (i32, i32) {
    %c0_i32 = arith.constant 0 : i32
    return %arg0, %arg1 : i32, i32
  }
}

</mosaic_0001>

<llo_original>
// kernel: tpu_custom_call.1
$region0: #{tpu_custom_call.1}
  #allocation0 [shape = 'u32[]', space=smem, size = 0x4, offset = 0x4, fixed_abs, tag = 'smem constant byte address 0x4 - core index']
  #allocation1 [shape = 'u32[144,128]{1,0:T(1,128)}', space=vmem, size = 0x12000, scoped, tag = 'internal scratch']
  #allocation2 [shape = 'f32[16,128]{1,0:T(8,128)}', space=vmem, size = 0x2000, scoped, tag = 'scratch operand']
  %s0 = inlined_call_operand.hbm [shape: f32[16,128], index: 0, kind: input, shape index: {}]
  %s1 = inlined_call_operand.hbm [shape: f32[128,128], index: 1, kind: input, shape index: {}]
  %s2 = inlined_call_operand.vmem [shape: f32[1,128], index: 2, kind: input, shape index: {}]
  %s3 = inlined_call_operand.hbm [shape: f32[128,128], index: 3, kind: input, shape index: {}]
  %s4 = inlined_call_operand.vmem [shape: f32[1,128], index: 4, kind: input, shape index: {}]
  %s5 = inlined_call_operand.hbm [shape: f32[16,128], index: 5, kind: output, shape index: {}]
  %s6 = sld [smem:[#allocation0]]
  $region46: #{tpu_custom_call.1} parent=0
    _
  %s8 = ssub.s32 1, %s6
  %s9 = scalar_select 0, %s8, %s6
  $region1: #{tpu_custom_call.1} parent=0
    #allocation3 [shape = 'u8[8192]{0}', space=vmem, size = 0x2000, scoped, tag = 'input window, operand 0, single buffered']
    #allocation4 [shape = 's32[1]{0}', space=sflag, size = 0x4, scoped, tag = 'scoped memory for tpu_custom_call.1']
    #allocation5 [shape = 's32[1]{0}', space=sflag, size = 0x4, scoped, tag = 'scoped memory for tpu_custom_call.1']
    #allocation6 [shape = 'u8[65536]{0}', space=vmem, size = 0x10000, scoped, tag = 'input window, operand 1, single buffered']
    #allocation7 [shape = 's32[1]{0}', space=sflag, size = 0x4, scoped, tag = 'scoped memory for tpu_custom_call.1']
    #allocation8 [shape = 'u8[65536]{0}', space=vmem, size = 0x10000, scoped, tag = 'input window, operand 3, single buffered']
    #allocation9 [shape = 'u8[8192]{0}', space=vmem, size = 0x2000, scoped, tag = 'output window, operand 0, single buffered']
    %10 = vsyncpa [#allocation4], 0
    %11 = vsyncpa [#allocation7], 0
    %12 = vsyncpa [#allocation5], 0
    // Predicated region
    $region2: #{tpu_custom_call.1} parent=1 // pred_check
      _
    $region3: #{tpu_custom_call.1} parent=1 // pred_check_branch
      %14 = sbr.rel (0) target = $region5
    $region4: #{tpu_custom_call.1} parent=1 // pred_region
      %s16 = ssub.s32 256, 256
      %17 = vsyncadd [#allocation4], %s16
      %s18 = sshll.u32 [#allocation3], 4
      %s19 = int_to_ptr.vmem [resolvable:$true] %s18
      %24 = dma.hbm_to_vmem [thread:$0]  %s0, 256, %s19, [#allocation4], 128, 128, 8
    $region5: #{tpu_custom_call.1} parent=1 // pred_fallthru
      _
    // Predicated region
    $region6: #{tpu_custom_call.1} parent=1 // pred_check
      _
    $region7: #{tpu_custom_call.1} parent=1 // pred_check_branch
      %26 = sbr.rel (0) target = $region9
    $region8: #{tpu_custom_call.1} parent=1 // pred_region
      %s28 = ssub.s32 2048, 2048
      %29 = vsyncadd [#allocation7], %s28
      %s30 = sshll.u32 [#allocation6], 4
      %s31 = int_to_ptr.vmem [resolvable:$true] %s30
      %36 = dma.hbm_to_vmem [thread:$0]  %s1, 2048, %s31, [#allocation7], 128, 128, 8
    $region9: #{tpu_custom_call.1} parent=1 // pred_fallthru
      _
    // Predicated region
    $region10: #{tpu_custom_call.1} parent=1 // pred_check
      _
    $region11: #{tpu_custom_call.1} parent=1 // pred_check_branch
      %38 = sbr.rel (0) target = $region13
    $region12: #{tpu_custom_call.1} parent=1 // pred_region
      _
    $region13: #{tpu_custom_call.1} parent=1 // pred_fallthru
      _
    // Predicated region
    $region14: #{tpu_custom_call.1} parent=1 // pred_check
      _
    $region15: #{tpu_custom_call.1} parent=1 // pred_check_branch
      %40 = sbr.rel (0) target = $region17
    $region16: #{tpu_custom_call.1} parent=1 // pred_region
      %s42 = ssub.s32 2048, 2048
      %43 = vsyncadd [#allocation7], %s42
      %s44 = sshll.u32 [#allocation8], 4
      %s45 = int_to_ptr.vmem [resolvable:$true] %s44
      %50 = dma.hbm_to_vmem [thread:$0]  %s3, 2048, %s45, [#allocation7], 128, 128, 8
    $region17: #{tpu_custom_call.1} parent=1 // pred_fallthru
      _
    // Predicated region
    $region18: #{tpu_custom_call.1} parent=1 // pred_check
      _
    $region19: #{tpu_custom_call.1} parent=1 // pred_check_branch
      %52 = sbr.rel (0) target = $region21
    $region20: #{tpu_custom_call.1} parent=1 // pred_region
      _
    $region21: #{tpu_custom_call.1} parent=1 // pred_fallthru
      _
    // Predicated region
    $region22: #{tpu_custom_call.1} parent=1 // pred_check
      _
    $region23: #{tpu_custom_call.1} parent=1 // pred_check_branch
      %54 = sbr.rel (0) target = $region25
    $region24: #{tpu_custom_call.1} parent=1 // pred_region
      %55 = dma.done [#allocation4], 256
    $region25: #{tpu_custom_call.1} parent=1 // pred_fallthru
      _
    // Predicated region
    $region26: #{tpu_custom_call.1} parent=1 // pred_check
      _
    $region27: #{tpu_custom_call.1} parent=1 // pred_check_branch
      %57 = sbr.rel (0) target = $region29
    $region28: #{tpu_custom_call.1} parent=1 // pred_region
      %58 = dma.done [#allocation7], 2048
    $region29: #{tpu_custom_call.1} parent=1 // pred_fallthru
      _
    // Predicated region
    $region30: #{tpu_custom_call.1} parent=1 // pred_check
      _
    $region31: #{tpu_custom_call.1} parent=1 // pred_check_branch
      %60 = sbr.rel (0) target = $region33
    $region32: #{tpu_custom_call.1} parent=1 // pred_region
      %61 = dma.done [#allocation7], 2048
    $region33: #{tpu_custom_call.1} parent=1 // pred_fallthru
      _
    %p62 = scmp.eq.s32.totalorder 0, 0
    // Predicated region
    $region34: #{tpu_custom_call.1} parent=1 // pred_check
      %p63 = pneg %p62
    $region35: #{tpu_custom_call.1} parent=1 // pred_check_branch
      %65 = sbr.rel (%p63) target = $region37
    $region36: #{tpu_custom_call.1} parent=1 // pred_region
      %v66 = vld [vmem:[#allocation3] sm:$0xff]
      %v67 = vld [vmem:[#allocation3 + $0x8] sm:$0xff]
      %v68 = vld [vmem:[#allocation6] sm:$0xff]
      %v69 = vld [vmem:[#allocation6 + $0x8] sm:$0xff]
      %v70 = vld [vmem:[#allocation6 + $0x10] sm:$0xff]
      %v71 = vld [vmem:[#allocation6 + $0x18] sm:$0xff]
      %v72 = vld [vmem:[#allocation6 + $0x20] sm:$0xff]
      %v73 = vld [vmem:[#allocation6 + $0x28] sm:$0xff]
      %v74 = vld [vmem:[#allocation6 + $0x30] sm:$0xff]
      %v75 = vld [vmem:[#allocation6 + $0x38] sm:$0xff]
      %v76 = vld [vmem:[#allocation6 + $0x40] sm:$0xff]
      %v77 = vld [vmem:[#allocation6 + $0x48] sm:$0xff]
      %v78 = vld [vmem:[#allocation6 + $0x50] sm:$0xff]
      %v79 = vld [vmem:[#allocation6 + $0x58] sm:$0xff]
      %v80 = vld [vmem:[#allocation6 + $0x60] sm:$0xff]
      %v81 = vld [vmem:[#allocation6 + $0x68] sm:$0xff]
      %v82 = vld [vmem:[#allocation6 + $0x70] sm:$0xff]
      %v83 = vld [vmem:[#allocation6 + $0x78] sm:$0xff]
      %v84 = vld [vmem:[%s2] sm:$0x1]
      %v86 = vlaneseq
      %v87 = vshrl.u32 %v86, 7
      %v88 = vsub.s32 0, %v87
      %v89 = vrot.slane %v84, %v88
      %91 = vmatprep.subr.mxu0 0.0
      %92 = vmatpush1.msra.mxu0 %v68
      %93 = vmatprep.subr.mxu0 0.0
      %94 = vmatpush1.msra.mxu0 %v69
      %95 = vmatprep.subr.mxu0 0.0
      %96 = vmatpush1.msra.mxu0 %v70
      %97 = vmatprep.subr.mxu0 0.0
      %98 = vmatpush1.msra.mxu0 %v71
      %99 = vmatprep.subr.mxu0 0.0
      %100 = vmatpush1.msra.mxu0 %v72
      %101 = vmatprep.subr.mxu0 0.0
      %102 = vmatpush1.msra.mxu0 %v73
      %103 = vmatprep.subr.mxu0 0.0
      %104 = vmatpush1.msra.mxu0 %v74
      %105 = vmatprep.subr.mxu0 0.0
      %106 = vmatpush1.msra.mxu0 %v75
      %107 = vmatprep.subr.mxu0 0.0
      %108 = vmatpush1.msra.mxu0 %v76
      %109 = vmatprep.subr.mxu0 0.0
      %110 = vmatpush1.msra.mxu0 %v77
      %111 = vmatprep.subr.mxu0 0.0
      %112 = vmatpush1.msra.mxu0 %v78
      %113 = vmatprep.subr.mxu0 0.0
      %114 = vmatpush1.msra.mxu0 %v79
      %115 = vmatprep.subr.mxu0 0.0
      %116 = vmatpush1.msra.mxu0 %v80
      %117 = vmatprep.subr.mxu0 0.0
      %118 = vmatpush1.msra.mxu0 %v81
      %119 = vmatprep.subr.mxu0 0.0
      %120 = vmatpush1.msra.mxu0 %v82
      %121 = vmatprep.subr.mxu0 0.0
      %122 = vmatpush1.msra.mxu0 %v83
      %123 = vmatprep.subr.mxu0 0.0
      %124 = vmatpush1.msra.mxu0 0.0
      %125 = vmatprep.subr.mxu0 0.0
      %126 = vmatpush1.msra.mxu0 0.0
      %127 = vmatprep.subr.mxu0 0.0
      %128 = vmatpush1.msra.mxu0 0.0
      %129 = vmatprep.subr.mxu0 0.0
      %130 = vmatpush1.msra.mxu0 0.0
      %131 = vmatprep.subr.mxu0 0.0
      %132 = vmatpush1.msra.mxu0 0.0
      %133 = vmatprep.subr.mxu0 0.0
      %134 = vmatpush1.msra.mxu0 0.0
      %135 = vmatprep.subr.mxu0 0.0
      %136 = vmatpush1.msra.mxu0 0.0
      %137 = vmatprep.subr.mxu0 0.0
      %138 = vmatpush1.msra.mxu0 0.0
      %139 = vmatprep.subr.mxu0 0.0
      %140 = vmatpush1.msra.mxu0 0.0
      %141 = vmatprep.subr.mxu0 0.0
      %142 = vmatpush1.msra.mxu0 0.0
      %143 = vmatprep.subr.mxu0 0.0
      %144 = vmatpush1.msra.mxu0 0.0
      %145 = vmatprep.subr.mxu0 0.0
      %146 = vmatpush1.msra.mxu0 0.0
      %147 = vmatprep.subr.mxu0 0.0
      %148 = vmatpush1.msra.mxu0 0.0
      %149 = vmatprep.subr.mxu0 0.0
      %150 = vmatpush1.msra.mxu0 0.0
      %151 = vmatprep.subr.mxu0 0.0
      %152 = vmatpush1.msra.mxu0 0.0
      %153 = vmatprep.subr.mxu0 0.0
      %154 = vmatpush1.msra.mxu0 0.0
      %155 = vmatprep.mubr.f32.mxu0 0.0
      %156 = vmatmul.mubr.f32.gmra.mrb[0].mxu0 %v66
      %v157 = vpop.f32.mrb[0].mxu0
      %v158 = vadd.f32 %v89, %v157
      %v159 = vpop.f32.mrb[0].mxu0
      %160 = vmatprep.mubr.f32.mxu0 0.0
      %161 = vmatmul.mubr.f32.gmra.mrb[0].mxu0 %v67
      %v162 = vpop.f32.mrb[0].mxu0
      %v163 = vadd.f32 %v89, %v162
      %v164 = vpop.f32.mrb[0].mxu0
      %165 = vdwg.mxu0
      %v166 = vmax.f32 %v158, 0.0
      %v167 = vmax.f32 %v163, 0.0
      %168 = vst [vmem:[#allocation2] sm:$0xff] %v166
      %169 = vst [vmem:[#allocation2 + $0x8] sm:$0xff] %v167
    $region37: #{tpu_custom_call.1} parent=1 // pred_fallthru
      _
    %v170 = vld [vmem:[#allocation2] sm:$0xff]
    %v171 = vld [vmem:[#allocation2 + $0x8] sm:$0xff]
    %v172 = vld [vmem:[#allocation8] sm:$0xff]
    %v173 = vld [vmem:[#allocation8 + $0x8] sm:$0xff]
    %v174 = vld [vmem:[#allocation8 + $0x10] sm:$0xff]
    %v175 = vld [vmem:[#allocation8 + $0x18] sm:$0xff]
    %v176 = vld [vmem:[#allocation8 + $0x20] sm:$0xff]
    %v177 = vld [vmem:[#allocation8 + $0x28] sm:$0xff]
    %v178 = vld [vmem:[#allocation8 + $0x30] sm:$0xff]
    %v179 = vld [vmem:[#allocation8 + $0x38] sm:$0xff]
    %v180 = vld [vmem:[#allocation8 + $0x40] sm:$0xff]
    %v181 = vld [vmem:[#allocation8 + $0x48] sm:$0xff]
    %v182 = vld [vmem:[#allocation8 + $0x50] sm:$0xff]
    %v183 = vld [vmem:[#allocation8 + $0x58] sm:$0xff]
    %v184 = vld [vmem:[#allocation8 + $0x60] sm:$0xff]
    %v185 = vld [vmem:[#allocation8 + $0x68] sm:$0xff]
    %v186 = vld [vmem:[#allocation8 + $0x70] sm:$0xff]
    %v187 = vld [vmem:[#allocation8 + $0x78] sm:$0xff]
    %v188 = vld [vmem:[%s4] sm:$0x1]
    %v190 = vlaneseq
    %v191 = vshrl.u32 %v190, 7
    %v192 = vsub.s32 0, %v191
    %v193 = vrot.slane %v188, %v192
    %195 = vmatprep.subr.mxu0 0.0
    %196 = vmatpush1.msra.mxu0 %v172
    %197 = vmatprep.subr.mxu0 0.0
    %198 = vmatpush1.msra.mxu0 %v173
    %199 = vmatprep.subr.mxu0 0.0
    %200 = vmatpush1.msra.mxu0 %v174
    %201 = vmatprep.subr.mxu0 0.0
    %202 = vmatpush1.msra.mxu0 %v175
    %203 = vmatprep.subr.mxu0 0.0
    %204 = vmatpush1.msra.mxu0 %v176
    %205 = vmatprep.subr.mxu0 0.0
    %206 = vmatpush1.msra.mxu0 %v177
    %207 = vmatprep.subr.mxu0 0.0
    %208 = vmatpush1.msra.mxu0 %v178
    %209 = vmatprep.subr.mxu0 0.0
    %210 = vmatpush1.msra.mxu0 %v179
    %211 = vmatprep.subr.mxu0 0.0
    %212 = vmatpush1.msra.mxu0 %v180
    %213 = vmatprep.subr.mxu0 0.0
    %214 = vmatpush1.msra.mxu0 %v181
    %215 = vmatprep.subr.mxu0 0.0
    %216 = vmatpush1.msra.mxu0 %v182
    %217 = vmatprep.subr.mxu0 0.0
    %218 = vmatpush1.msra.mxu0 %v183
    %219 = vmatprep.subr.mxu0 0.0
    %220 = vmatpush1.msra.mxu0 %v184
    %221 = vmatprep.subr.mxu0 0.0
    %222 = vmatpush1.msra.mxu0 %v185
    %223 = vmatprep.subr.mxu0 0.0
    %224 = vmatpush1.msra.mxu0 %v186
    %225 = vmatprep.subr.mxu0 0.0
    %226 = vmatpush1.msra.mxu0 %v187
    %227 = vmatprep.subr.mxu0 0.0
    %228 = vmatpush1.msra.mxu0 0.0
    %229 = vmatprep.subr.mxu0 0.0
    %230 = vmatpush1.msra.mxu0 0.0
    %231 = vmatprep.subr.mxu0 0.0
    %232 = vmatpush1.msra.mxu0 0.0
    %233 = vmatprep.subr.mxu0 0.0
    %234 = vmatpush1.msra.mxu0 0.0
    %235 = vmatprep.subr.mxu0 0.0
    %236 = vmatpush1.msra.mxu0 0.0
    %237 = vmatprep.subr.mxu0 0.0
    %238 = vmatpush1.msra.mxu0 0.0
    %239 = vmatprep.subr.mxu0 0.0
    %240 = vmatpush1.msra.mxu0 0.0
    %241 = vmatprep.subr.mxu0 0.0
    %242 = vmatpush1.msra.mxu0 0.0
    %243 = vmatprep.subr.mxu0 0.0
    %244 = vmatpush1.msra.mxu0 0.0
    %245 = vmatprep.subr.mxu0 0.0
    %246 = vmatpush1.msra.mxu0 0.0
    %247 = vmatprep.subr.mxu0 0.0
    %248 = vmatpush1.msra.mxu0 0.0
    %249 = vmatprep.subr.mxu0 0.0
    %250 = vmatpush1.msra.mxu0 0.0
    %251 = vmatprep.subr.mxu0 0.0
    %252 = vmatpush1.msra.mxu0 0.0
    %253 = vmatprep.subr.mxu0 0.0
    %254 = vmatpush1.msra.mxu0 0.0
    %255 = vmatprep.subr.mxu0 0.0
    %256 = vmatpush1.msra.mxu0 0.0
    %257 = vmatprep.subr.mxu0 0.0
    %258 = vmatpush1.msra.mxu0 0.0
    %259 = vmatprep.mubr.f32.mxu0 0.0
    %260 = vmatmul.mubr.f32.gmra.mrb[0].mxu0 %v170
    %v261 = vpop.f32.mrb[0].mxu0
    %v262 = vadd.f32 %v193, %v261
    %v263 = vpop.f32.mrb[0].mxu0
    %264 = vmatprep.mubr.f32.mxu0 0.0
    %265 = vmatmul.mubr.f32.gmra.mrb[0].mxu0 %v171
    %v266 = vpop.f32.mrb[0].mxu0
    %v267 = vadd.f32 %v193, %v266
    %v268 = vpop.f32.mrb[0].mxu0
    %269 = vdwg.mxu0
    %270 = vst [vmem:[#allocation9] sm:$0xff] %v262
    %271 = vst [vmem:[#allocation9 + $0x8] sm:$0xff] %v267
    // Predicated region
    $region38: #{tpu_custom_call.1} parent=1 // pred_check
      _
    $region39: #{tpu_custom_call.1} parent=1 // pred_check_branch
      %273 = sbr.rel (0) target = $region41
    $region40: #{tpu_custom_call.1} parent=1 // pred_region
      %s275 = ssub.s32 256, 256
      %276 = vsyncadd [#allocation5], %s275
      %s277 = sshll.u32 [#allocation9], 4
      %s278 = int_to_ptr.vmem [resolvable:$true] %s277
      %283 = dma.vmem_to_hbm [thread:$0]  %s278, 256, %s5, [#allocation5], 128, 128, 8
    $region41: #{tpu_custom_call.1} parent=1 // pred_fallthru
      _
    // Predicated region
    $region42: #{tpu_custom_call.1} parent=1 // pred_check
      _
    $region43: #{tpu_custom_call.1} parent=1 // pred_check_branch
      %285 = sbr.rel (0) target = $region45
    $region44: #{tpu_custom_call.1} parent=1 // pred_region
      %286 = dma.done [#allocation5], 256
    $region45: #{tpu_custom_call.1} parent=1 // pred_fallthru
      _
    %287 = vsyncpa [#allocation4], 1
    %288 = vsyncpa [#allocation7], 1
    %289 = vsyncpa [#allocation5], 1

</llo_original>
